<compile_context>
chip_gen: v7x
topology: tpu7x:2x2x1
jax: 0.10.0
libtpu: 0.0.40
codegen_flags: <defaults>
</compile_context>

<pallas_src>
import jax
import jax.numpy as jnp
from jax.experimental import pallas as pl
from jax.experimental.pallas import tpu as pltpu

_LANES = 512          # lane-dense last dim (multiple of 128)
_TILE_ROWS_MAX = 1024 # rows per grid step -> 1024*512*4 B = 2 MiB f32 per tile
_SMALL_N = 4096       # below this, plain XLA is faster than a kernel launch


def _affine_kernel(wb_ref, x_ref, o_ref):
    # wb_ref: packed (2,) [weight, bias] in SMEM (whole array, not gridded).
    # x_ref / o_ref: (tile_rows, _LANES) lane-dense VMEM tiles.
    w = wb_ref[0]
    b = wb_ref[1]
    o_ref[...] = x_ref[...] * w + b


def linear_1x1(x, weight, bias, *, force_pallas=False):
    """Forward of nn.Linear(1, 1): x (N, 1) f32, weight (1, 1), bias (1,) -> (N, 1)."""
    n, f = x.shape
    assert f == 1 and weight.shape == (1, 1) and bias.shape == (1,)
    dtype = x.dtype

    if n < _SMALL_N and not force_pallas:
        # Tiny batch: pallas_call is pure overhead; fused XLA elementwise wins.
        return x * weight[0, 0] + bias[0]

    # ---- lane-dense reshape: (N, 1) -> flat -> (rows, _LANES) ----------------
    flat = x.reshape(-1)
    chunk = 8 * _LANES  # keep rows a multiple of 8 sublanes
    padded = pl.cdiv(n, chunk) * chunk
    if padded != n:
        flat = jnp.pad(flat, (0, padded - n))
    rows = padded // _LANES
    x2d = flat.reshape(rows, _LANES)

    tile_rows = min(_TILE_ROWS_MAX, rows)   # multiple of 8 by construction
    grid = (pl.cdiv(rows, tile_rows),)

    # Single packed scalar-parameter array resident in SMEM.
    wb = jnp.concatenate([weight.reshape(1), bias.reshape(1)]).astype(dtype)

    y2d = pl.pallas_call(
        _affine_kernel,
        out_shape=jax.ShapeDtypeStruct((rows, _LANES), dtype),
        grid=grid,
        in_specs=[
            pl.BlockSpec(memory_space=pltpu.MemorySpace.SMEM),      # packed [w, b]
            pl.BlockSpec((tile_rows, _LANES), lambda i: (i, 0)),    # x tiles
        ],
        out_specs=pl.BlockSpec((tile_rows, _LANES), lambda i: (i, 0)),
        compiler_params=pltpu.CompilerParams(
            dimension_semantics=("parallel",),      # lets v7x use both TensorCores
            vmem_limit_bytes=32 * 1024 * 1024,      # explicit, fits all generations
        ),
    )(wb, x2d)

    # Undo padding / lane-dense view -> (N, 1), matching nn.Linear output layout.
    return y2d.reshape(-1)[:n].reshape(n, 1)


if __name__ == "__main__":
    key = jax.random.PRNGKey(0)
    k_w, k_b, k_small, k_big = jax.random.split(key, 4)

    # Deterministic nn.Linear(1, 1) parameters.
    weight = jax.random.uniform(k_w, (1, 1), jnp.float32, -1.0, 1.0)
    bias = jax.random.uniform(k_b, (1,), jnp.float32, -1.0, 1.0)

    # Small batch implied by the module: (batch=8, in_features=1). Force the Pallas
    # path so the kernel itself is exercised even at this tiny size.
    x_small = jax.random.normal(k_small, (8, 1), dtype=jnp.float32)
    y_small = jax.block_until_ready(linear_1x1(x_small, weight, bias, force_pallas=True))
    ref_small = x_small @ weight.T + bias
    assert y_small.shape == (8, 1)
    assert jnp.allclose(y_small, ref_small, atol=1e-6), "mismatch vs reference (small)"

    # Larger batch exercising the lane-dense padded/tiled path (non-multiple of 512).
    x_big = jax.random.normal(k_big, (5000, 1), dtype=jnp.float32)
    y_big = jax.block_until_ready(linear_1x1(x_big, weight, bias))
    ref_big = x_big @ weight.T + bias
    assert y_big.shape == (5000, 1)
    assert jnp.allclose(y_big, ref_big, atol=1e-6), "mismatch vs reference (big)"

    print("KERNEL_OK")
</pallas_src>

<mosaic_0001>
module attributes {stable_mosaic.version = 11 : i64} {
  func.func @_affine_kernel(%arg0: i32, %arg1: memref<2xf32, #tpu.memory_space<smem>>, %arg2: memref<8x512xf32, #tpu.memory_space<vmem>>, %arg3: memref<8x512xf32, #tpu.memory_space<vmem>>) attributes {dimension_semantics = [#tpu.dimension_semantics<parallel>], iteration_bounds = array<i64: 1>, scalar_prefetch = 0 : i64, scratch_operands = 0 : i64, tpu.core_type = #tpu.core_type<tc>, window_params = [{transform_indices = @transform_0, window_bounds = array<i64: 2>}, {transform_indices = @transform_1, window_bounds = array<i64: 8, 512>}, {transform_indices = @transform_2, window_bounds = array<i64: 8, 512>}]} {
    %c0 = arith.constant 0 : index
    %0 = memref.load %arg1[%c0] : memref<2xf32, #tpu.memory_space<smem>>
    %c1 = arith.constant 1 : index
    %1 = memref.load %arg1[%c1] : memref<2xf32, #tpu.memory_space<smem>>
    %c0_0 = arith.constant 0 : index
    %c0_1 = arith.constant 0 : index
    %2 = vector.load %arg2[%c0_0, %c0_1] : memref<8x512xf32, #tpu.memory_space<vmem>>, vector<8x512xf32>
    %3 = vector.broadcast %0 : f32 to vector<8x512xf32>
    %4 = arith.mulf %2, %3 : vector<8x512xf32>
    %5 = vector.broadcast %1 : f32 to vector<8x512xf32>
    %6 = arith.addf %4, %5 : vector<8x512xf32>
    %c0_2 = arith.constant 0 : index
    %c0_3 = arith.constant 0 : index
    %7 = vector.load %arg3[%c0_2, %c0_3] : memref<8x512xf32, #tpu.memory_space<vmem>>, vector<8x512xf32>
    tpu.vector_store %arg3[%c0_2, %c0_3], %6 {strides = array<i32>} : memref<8x512xf32, #tpu.memory_space<vmem>>, vector<8x512xf32>,
    return
  }
  func.func @transform_0(%arg0: i32) -> i32 {
    %c0_i32 = arith.constant 0 : i32
    %c0_i32_0 = arith.constant 0 : i32
    return %c0_i32 : i32
  }
  func.func @transform_1(%arg0: i32) -> (i32, i32) {
    %c0_i32 = arith.constant 0 : i32
    %c0_i32_0 = arith.constant 0 : i32
    return %arg0, %c0_i32 : i32, i32
  }
  func.func @transform_2(%arg0: i32) -> (i32, i32) {
    %c0_i32 = arith.constant 0 : i32
    %c0_i32_0 = arith.constant 0 : i32
    return %arg0, %c0_i32 : i32, i32
  }
}

</mosaic_0001>

<llo_original>
// kernel: tpu_custom_call.1
$region0: #{tpu_custom_call.1}
  #allocation0 [shape = 'u32[]', space=smem, size = 0x4, offset = 0x4, fixed_abs, tag = 'smem constant byte address 0x4 - core index']
  #allocation1 [shape = 'u32[144,128]{1,0:T(1,128)}', space=vmem, size = 0x12000, scoped, tag = 'internal scratch']
  %s0 = inlined_call_operand.hbm [shape: f32[2], index: 0, kind: input, shape index: {}]
  %s1 = inlined_call_operand.hbm [shape: f32[8,512], index: 1, kind: input, shape index: {}]
  %s2 = inlined_call_operand.hbm [shape: f32[8,512], index: 2, kind: output, shape index: {}]
  %s3 = sld [smem:[#allocation0]]
  $region26: #{tpu_custom_call.1} parent=0
    _
  %s5 = ssub.s32 1, %s3
  %s6 = scalar_select 0, %s5, %s3
  $region1: #{tpu_custom_call.1} parent=0
    #allocation2 [shape = 'u8[512]{0}', space=smem, size = 0x200, scoped, tag = 'input window, operand 0, single buffered']
    #allocation3 [shape = 's32[1]{0}', space=sflag, size = 0x4, scoped, tag = 'scoped memory for tpu_custom_call.1']
    #allocation4 [shape = 's32[1]{0}', space=sflag, size = 0x4, scoped, tag = 'scoped memory for tpu_custom_call.1']
    #allocation5 [shape = 's32[1]{0}', space=sflag, size = 0x4, scoped, tag = 'scoped memory for tpu_custom_call.1']
    #allocation6 [shape = 'u8[16384]{0}', space=vmem, size = 0x4000, scoped, tag = 'input window, operand 1, single buffered']
    #allocation7 [shape = 'u8[16384]{0}', space=vmem, size = 0x4000, scoped, tag = 'output window, operand 0, single buffered']
    %7 = vsyncpa [#allocation5], 0
    %8 = vsyncpa [#allocation3], 0
    %9 = vsyncpa [#allocation4], 0
    // Predicated region
    $region2: #{tpu_custom_call.1} parent=1 // pred_check
      _
    $region3: #{tpu_custom_call.1} parent=1 // pred_check_branch
      %11 = sbr.rel (0) target = $region5
    $region4: #{tpu_custom_call.1} parent=1 // pred_region
      %s13 = ssub.s32 16, 16
      %14 = vsyncadd [#allocation5], %s13
      %17 = dma.hbm_to_smem %s0, 16, [#allocation2], [#allocation5]
    $region5: #{tpu_custom_call.1} parent=1 // pred_fallthru
      _
    // Predicated region
    $region6: #{tpu_custom_call.1} parent=1 // pred_check
      _
    $region7: #{tpu_custom_call.1} parent=1 // pred_check_branch
      %19 = sbr.rel (0) target = $region9
    $region8: #{tpu_custom_call.1} parent=1 // pred_region
      %s21 = ssub.s32 512, 512
      %22 = vsyncadd [#allocation3], %s21
      %s24 = sshll.u32 [#allocation6], 4
      %s25 = int_to_ptr.vmem [resolvable:$true] %s24
      %27 = dma.hbm_to_vmem [thread:$0]  %s1, 512, %s25, [#allocation3]
    $region9: #{tpu_custom_call.1} parent=1 // pred_fallthru
      _
    // Predicated region
    $region10: #{tpu_custom_call.1} parent=1 // pred_check
      _
    $region11: #{tpu_custom_call.1} parent=1 // pred_check_branch
      %29 = sbr.rel (0) target = $region13
    $region12: #{tpu_custom_call.1} parent=1 // pred_region
      %30 = dma.done [#allocation5], 16
    $region13: #{tpu_custom_call.1} parent=1 // pred_fallthru
      _
    // Predicated region
    $region14: #{tpu_custom_call.1} parent=1 // pred_check
      _
    $region15: #{tpu_custom_call.1} parent=1 // pred_check_branch
      %32 = sbr.rel (0) target = $region17
    $region16: #{tpu_custom_call.1} parent=1 // pred_region
      %33 = dma.done [#allocation3], 512
    $region17: #{tpu_custom_call.1} parent=1 // pred_fallthru
      _
    %34 = sfence
    %s35 = sld [smem:[#allocation2]]
    %s36 = sld [smem:[#allocation2 + $0x1]]
    %v37 = vld [vmem:[#allocation6] sm:$0xff]
    %v38 = vld [vmem:[#allocation6 + $0x8] sm:$0xff]
    %v39 = vld [vmem:[#allocation6 + $0x10] sm:$0xff]
    %v40 = vld [vmem:[#allocation6 + $0x18] sm:$0xff]
    %v41 = vstv %s35
    %v42 = vmul.f32 %v37, %v41
    %v43 = vmul.f32 %v38, %v41
    %v44 = vmul.f32 %v39, %v41
    %v45 = vmul.f32 %v40, %v41
    %v46 = vstv %s36
    %v47 = vadd.f32 %v42, %v46
    %v48 = vadd.f32 %v43, %v46
    %v49 = vadd.f32 %v44, %v46
    %v50 = vadd.f32 %v45, %v46
    %51 = vst [vmem:[#allocation7] sm:$0xff] %v47
    %52 = vst [vmem:[#allocation7 + $0x8] sm:$0xff] %v48
    %53 = vst [vmem:[#allocation7 + $0x10] sm:$0xff] %v49
    %54 = vst [vmem:[#allocation7 + $0x18] sm:$0xff] %v50
    // Predicated region
    $region18: #{tpu_custom_call.1} parent=1 // pred_check
      _
    $region19: #{tpu_custom_call.1} parent=1 // pred_check_branch
      %56 = sbr.rel (0) target = $region21
    $region20: #{tpu_custom_call.1} parent=1 // pred_region
      %s58 = ssub.s32 512, 512
      %59 = vsyncadd [#allocation4], %s58
      %s61 = sshll.u32 [#allocation7], 4
      %s62 = int_to_ptr.vmem [resolvable:$true] %s61
      %64 = dma.vmem_to_hbm [thread:$0]  %s62, 512, %s2, [#allocation4]
    $region21: #{tpu_custom_call.1} parent=1 // pred_fallthru
      _
    // Predicated region
    $region22: #{tpu_custom_call.1} parent=1 // pred_check
      _
    $region23: #{tpu_custom_call.1} parent=1 // pred_check_branch
      %66 = sbr.rel (0) target = $region25
    $region24: #{tpu_custom_call.1} parent=1 // pred_region
      %67 = dma.done [#allocation4], 512
    $region25: #{tpu_custom_call.1} parent=1 // pred_fallthru
      _
    %68 = vsyncpa [#allocation3], 1
    %69 = vsyncpa [#allocation4], 1
    %70 = vsyncpa [#allocation5], 1

</llo_original>
